<compile_context>
chip_gen: v6e
topology: v6e:2x2x1
jax: 0.10.0
libtpu: 0.0.40
codegen_flags: <defaults>
</compile_context>

<pallas_src>
import jax
import jax.numpy as jnp
from jax.experimental import pallas as pl
from jax.experimental.pallas import tpu as pltpu

NEG_INF = -1e30                     # large finite negative; avoids inf-inf NaN paths
VMEM_LIMIT = 48 * 1024 * 1024       # explicit scoped-VMEM cap (safe on v5e/v6e/v7x)


# --------------------------------------------------------------------------------------------
# Pass 1: fused QKV projection
# --------------------------------------------------------------------------------------------
def qkv_proj_kernel(x_ref, w_ref, o_ref):
    o_ref[0] = jnp.dot(x_ref[0], w_ref[...],
                       preferred_element_type=jnp.float32).astype(o_ref.dtype)


def qkv_projection(x_bf16, w_qkv, *, row_tile):
    B, T, C = x_bf16.shape
    three_hh = w_qkv.shape[1]
    tr = min(row_tile, T)
    assert T % tr == 0
    return pl.pallas_call(
        qkv_proj_kernel,
        out_shape=jax.ShapeDtypeStruct((B, T, three_hh), jnp.bfloat16),
        grid_spec=pltpu.PrefetchScalarGridSpec(
            num_scalar_prefetch=0,
            grid=(B, T // tr),
            in_specs=[
                pl.BlockSpec((1, tr, C), lambda b, i: (b, i, 0)),
                pl.BlockSpec((C, three_hh), lambda b, i: (0, 0)),
            ],
            out_specs=pl.BlockSpec((1, tr, three_hh), lambda b, i: (b, i, 0)),
        ),
        compiler_params=pltpu.CompilerParams(
            dimension_semantics=("parallel", "parallel"),
            vmem_limit_bytes=VMEM_LIMIT),
    )(x_bf16, w_qkv)


# --------------------------------------------------------------------------------------------
# Pass 2: flash attention over a lower-triangular tile schedule + fused output projection
# --------------------------------------------------------------------------------------------
def flash_mha_kernel(qi_tbl, ki_tbl, q_ref, k_ref, v_ref, wp_ref, bp_ref, o_ref,
                     m_sc, l_sc, acc_sc):
    t = pl.program_id(1)
    qi = qi_tbl[t]
    ki = ki_tbl[t]

    # -- first kv step of this q-tile run: reset the online-softmax state --------------------
    @pl.when(ki == 0)
    def _init():
        m_sc[...] = jnp.full_like(m_sc, NEG_INF)
        l_sc[...] = jnp.zeros_like(l_sc)
        acc_sc[...] = jnp.zeros_like(acc_sc)

    def attend(masked):
        q = q_ref[0]                                                  # (H, tq, hs) bf16
        k = k_ref[0]                                                  # (H, tk, hs) bf16
        v = v_ref[0]                                                  # (H, tk, hs) bf16
        s = jnp.einsum('hqd,hkd->hqk', q, k,
                       preferred_element_type=jnp.float32)            # (H, tq, tk) f32
        if masked:
            # only the diagonal tile pays for the causal mask (square, aligned tiles)
            row = jax.lax.broadcasted_iota(jnp.int32, s.shape, 1)
            col = jax.lax.broadcasted_iota(jnp.int32, s.shape, 2)
            s = jnp.where(row >= col, s, NEG_INF)
        m_prev = m_sc[...]                                            # (H, tq, 1)
        m_new = jnp.maximum(m_prev, jnp.max(s, axis=-1, keepdims=True))
        alpha = jnp.exp(m_prev - m_new)
        p = jnp.exp(s - m_new)                                        # (H, tq, tk) f32
        l_sc[...] = alpha * l_sc[...] + jnp.sum(p, axis=-1, keepdims=True)
        acc_sc[...] = alpha * acc_sc[...] + jnp.einsum(
            'hqk,hkd->hqd', p.astype(jnp.bfloat16), v,
            preferred_element_type=jnp.float32)
        m_sc[...] = m_new
        # attention-weight dropout: identity in eval mode

    # -- off-diagonal kv tiles: no mask needed ------------------------------------------------
    @pl.when(ki < qi)
    def _off_diag():
        attend(masked=False)

    # -- diagonal tile == last kv step of this q-tile: mask, attend, project, write ----------
    @pl.when(ki == qi)
    def _diag_and_finalize():
        attend(masked=True)
        inv_l = pl.reciprocal(l_sc[...], approx=True)                 # (H, tq, 1)
        head_out = (acc_sc[...] * inv_l).astype(jnp.bfloat16)          # (H, tq, hs)
        proj = jnp.einsum('hqd,hdc->hqc', head_out, wp_ref[...],
                          preferred_element_type=jnp.float32)          # (H, tq, C)
        out = jnp.sum(proj, axis=0) + bp_ref[...]                      # (tq, C)
        # output dropout: identity in eval mode
        o_ref[0] = out.astype(o_ref.dtype)


# --------------------------------------------------------------------------------------------
# Parameter packing (done once, outside the hot path)
# --------------------------------------------------------------------------------------------
def pack_mha_params(wq, wk, wv, wproj, bproj, *, num_heads, head_size):
    """wq/wk/wv: (C, H*hs); wproj: (H*hs, C) (already W^T); bproj: (1, C)."""
    C = wq.shape[0]
    scale = head_size ** -0.5
    w_qkv = jnp.concatenate([wq * scale, wk, wv], axis=-1).astype(jnp.bfloat16)   # (C, 3Hh)
    wproj_h = wproj.reshape(num_heads, head_size, C).astype(jnp.bfloat16)         # (H, hs, C)
    bproj_f32 = bproj.astype(jnp.float32).reshape(1, C)
    return w_qkv, wproj_h, bproj_f32


# --------------------------------------------------------------------------------------------
# Wrapper
# --------------------------------------------------------------------------------------------
def multi_head_attention(x, packed_params, *, num_heads, head_size,
                         q_tile=256, kv_tile=256, proj_row_tile=256):
    """x: (B, T, C) -> (B, T, C), matching the PyTorch MultiHeadAttention forward (eval)."""
    w_qkv, wproj_h, bproj = packed_params
    B, T, C = x.shape
    Hh = num_heads * head_size
    assert w_qkv.shape == (C, 3 * Hh)
    assert wproj_h.shape == (num_heads, head_size, C)
    assert bproj.shape == (1, C)

    tq = min(q_tile, T)
    tk = min(kv_tile, T)
    assert tq == tk, "block-causal schedule assumes square, aligned (tq == tk) tiles"
    assert T % tq == 0
    nq = T // tq
    n_tri = nq * (nq + 1) // 2

    # lower-triangular (q-tile, kv-tile) schedule -> scalar-prefetch tables
    qi_of, ki_of = [], []
    for qi in range(nq):
        for ki in range(qi + 1):
            qi_of.append(qi)
            ki_of.append(ki)
    qi_tbl = jnp.asarray(qi_of, dtype=jnp.int32)
    ki_tbl = jnp.asarray(ki_of, dtype=jnp.int32)

    # Pass 1: QKV projection (K/V projected exactly once per token).
    xb = x.astype(jnp.bfloat16)
    qkv = qkv_projection(xb, w_qkv, row_tile=proj_row_tile)            # (B, T, 3Hh) bf16
    qkv = qkv.reshape(B, T, 3, num_heads, head_size)
    qkv = jnp.transpose(qkv, (2, 0, 3, 1, 4))                           # (3, B, H, T, hs)
    q, k, v = qkv[0], qkv[1], qkv[2]

    # Pass 2: flash attention + fused output projection.
    grid_spec = pltpu.PrefetchScalarGridSpec(
        num_scalar_prefetch=2,
        grid=(B, n_tri),
        in_specs=[
            pl.BlockSpec((1, num_heads, tq, head_size),
                         lambda b, t, qi, ki: (b, 0, qi[t], 0)),        # Q (all heads)
            pl.BlockSpec((1, num_heads, tk, head_size),
                         lambda b, t, qi, ki: (b, 0, ki[t], 0)),        # K (all heads)
            pl.BlockSpec((1, num_heads, tk, head_size),
                         lambda b, t, qi, ki: (b, 0, ki[t], 0)),        # V (all heads)
            pl.BlockSpec((num_heads, head_size, C),
                         lambda b, t, qi, ki: (0, 0, 0)),               # Wproj (head-major)
            pl.BlockSpec((1, C), lambda b, t, qi, ki: (0, 0)),          # proj bias
        ],
        out_specs=pl.BlockSpec((1, tq, C), lambda b, t, qi, ki: (b, qi[t], 0)),
        scratch_shapes=[
            pltpu.VMEM((num_heads, tq, 1), jnp.float32),                # running max
            pltpu.VMEM((num_heads, tq, 1), jnp.float32),                # running sum
            pltpu.VMEM((num_heads, tq, head_size), jnp.float32),        # attention accumulator
        ],
    )

    return pl.pallas_call(
        flash_mha_kernel,
        out_shape=jax.ShapeDtypeStruct((B, T, C), x.dtype),
        grid_spec=grid_spec,
        compiler_params=pltpu.CompilerParams(
            dimension_semantics=("parallel", "arbitrary"),
            vmem_limit_bytes=VMEM_LIMIT),
    )(qi_tbl, ki_tbl, q, k, v, wproj_h, bproj)


# --------------------------------------------------------------------------------------------
# Plain-JAX fp32 reference mirroring the PyTorch forward (eval mode)
# --------------------------------------------------------------------------------------------
def reference_mha(x, wq, wk, wv, wproj, bproj, *, num_heads, head_size):
    B, T, C = x.shape
    q = x @ wq
    k = x @ wk
    v = x @ wv
    mask = jnp.tril(jnp.ones((T, T), dtype=bool))
    outs = []
    for h in range(num_heads):
        lo, hi = h * head_size, (h + 1) * head_size
        wei = (q[..., lo:hi] @ jnp.swapaxes(k[..., lo:hi], -2, -1)) * head_size ** (-0.5)
        wei = jnp.where(mask, wei, -jnp.inf)
        wei = jax.nn.softmax(wei, axis=-1)
        outs.append(wei @ v[..., lo:hi])
    cat = jnp.concatenate(outs, axis=-1)
    return cat @ wproj + bproj


if __name__ == "__main__":
    B = 2
    n_embd = 32
    num_heads = 4
    head_size = n_embd // num_heads          # 8
    Hh = num_heads * head_size

    key = jax.random.PRNGKey(0)
    kx, kx2, kx3, kq, kk, kv, kp, kb = jax.random.split(key, 8)

    wq = jax.random.normal(kq, (n_embd, Hh), dtype=jnp.float32) * 0.05
    wk = jax.random.normal(kk, (n_embd, Hh), dtype=jnp.float32) * 0.05
    wv = jax.random.normal(kv, (n_embd, Hh), dtype=jnp.float32) * 0.05
    wproj = jax.random.normal(kp, (Hh, n_embd), dtype=jnp.float32) * 0.05
    bproj = jax.random.normal(kb, (1, n_embd), dtype=jnp.float32) * 0.05

    packed = pack_mha_params(wq, wk, wv, wproj, bproj,
                             num_heads=num_heads, head_size=head_size)

    # bf16 MXU operands -> compare against the fp32 reference at bf16-level tolerance.
    TOL = dict(atol=2e-2, rtol=2e-2)

    # Test 1: single-tile case (T == tile): one triangular step.
    T1 = 8
    x1 = jax.random.normal(kx, (B, T1, n_embd), dtype=jnp.float32)
    out1 = multi_head_attention(x1, packed, num_heads=num_heads, head_size=head_size)
    out1 = jax.block_until_ready(out1)
    ref1 = reference_mha(x1, wq, wk, wv, wproj, bproj,
                         num_heads=num_heads, head_size=head_size)
    assert out1.shape == (B, T1, n_embd)
    assert jnp.allclose(out1, ref1, **TOL), "mismatch vs reference (T=8)"

    # Test 2: two q-tiles (one off-diagonal + two diagonal steps).
    T2 = 16
    x2 = jax.random.normal(kx2, (B, T2, n_embd), dtype=jnp.float32)
    out2 = multi_head_attention(x2, packed, num_heads=num_heads, head_size=head_size,
                                q_tile=8, kv_tile=8)
    out2 = jax.block_until_ready(out2)
    ref2 = reference_mha(x2, wq, wk, wv, wproj, bproj,
                         num_heads=num_heads, head_size=head_size)
    assert out2.shape == (B, T2, n_embd)
    assert jnp.allclose(out2, ref2, **TOL), "mismatch vs reference (T=16, tiled)"

    # Test 3: four q-tiles -> triangular schedule of 10 steps, exercises multi-step carry.
    T3 = 32
    x3 = jax.random.normal(kx3, (B, T3, n_embd), dtype=jnp.float32)
    out3 = multi_head_attention(x3, packed, num_heads=num_heads, head_size=head_size,
                                q_tile=8, kv_tile=8)
    out3 = jax.block_until_ready(out3)
    ref3 = reference_mha(x3, wq, wk, wv, wproj, bproj,
                         num_heads=num_heads, head_size=head_size)
    assert out3.shape == (B, T3, n_embd)
    assert jnp.allclose(out3, ref3, **TOL), "mismatch vs reference (T=32, triangular grid)"

    print("KERNEL_OK")
</pallas_src>

<mosaic_0001>
module attributes {stable_mosaic.version = 11 : i64} {
  func.func @qkv_proj_kernel(%arg0: i32, %arg1: i32, %arg2: memref<1x8x32xbf16, #tpu.memory_space<vmem>>, %arg3: memref<32x96xbf16, #tpu.memory_space<vmem>>, %arg4: memref<1x8x96xbf16, #tpu.memory_space<vmem>>) attributes {dimension_semantics = [#tpu.dimension_semantics<parallel>, #tpu.dimension_semantics<parallel>], iteration_bounds = array<i64: 2, 1>, scalar_prefetch = 0 : i64, scratch_operands = 0 : i64, tpu.core_type = #tpu.core_type<tc>, window_params = [{transform_indices = @transform_0, window_bounds = array<i64: 1, 8, 32>}, {pipeline_mode = #tpu.pipeline_mode<synchronous>, transform_indices = @transform_1, window_bounds = array<i64: 32, 96>}, {transform_indices = @transform_2, window_bounds = array<i64: 1, 8, 96>}]} {
    %c0 = arith.constant 0 : index
    %c0_0 = arith.constant 0 : index
    %c0_1 = arith.constant 0 : index
    %0 = vector.load %arg2[%c0, %c0_0, %c0_1] : memref<1x8x32xbf16, #tpu.memory_space<vmem>>, vector<1x8x32xbf16>
    %1 = vector.shape_cast %0 : vector<1x8x32xbf16> to vector<8x32xbf16>
    %c0_2 = arith.constant 0 : index
    %c0_3 = arith.constant 0 : index
    %2 = vector.load %arg3[%c0_2, %c0_3] : memref<32x96xbf16, #tpu.memory_space<vmem>>, vector<32x96xbf16>
    %cst = arith.constant dense<0.000000e+00> : vector<8x96xf32>
    %3 = tpu.matmul %1, %2, %cst {dimension_numbers = #tpu.dot_dimension_numbers<[1], [0], [0], [1], [0, 0, 1, 1], [], []>} : vector<8x32xbf16>, vector<32x96xbf16>, vector<8x96xf32> -> vector<8x96xf32>
    %4 = arith.truncf %3 : vector<8x96xf32> to vector<8x96xbf16>
    %c0_4 = arith.constant 0 : index
    %c0_5 = arith.constant 0 : index
    %c0_6 = arith.constant 0 : index
    %5 = vector.load %arg4[%c0_4, %c0_5, %c0_6] : memref<1x8x96xbf16, #tpu.memory_space<vmem>>, vector<1x8x96xbf16>
    %6 = vector.shape_cast %5 : vector<1x8x96xbf16> to vector<8x96xbf16>
    %7 = vector.shape_cast %4 : vector<8x96xbf16> to vector<1x8x96xbf16>
    tpu.vector_store %arg4[%c0_4, %c0_5, %c0_6], %7 {strides = array<i32>} : memref<1x8x96xbf16, #tpu.memory_space<vmem>>, vector<1x8x96xbf16>,
    return
  }
  func.func @transform_0(%arg0: i32, %arg1: i32) -> (i32, i32, i32) {
    %c0_i32 = arith.constant 0 : i32
    %c0_i32_0 = arith.constant 0 : i32
    return %arg0, %arg1, %c0_i32 : i32, i32, i32
  }
  func.func @transform_1(%arg0: i32, %arg1: i32) -> (i32, i32) {
    %c0_i32 = arith.constant 0 : i32
    %c0_i32_0 = arith.constant 0 : i32
    %c0_i32_1 = arith.constant 0 : i32
    return %c0_i32, %c0_i32_0 : i32, i32
  }
  func.func @transform_2(%arg0: i32, %arg1: i32) -> (i32, i32, i32) {
    %c0_i32 = arith.constant 0 : i32
    %c0_i32_0 = arith.constant 0 : i32
    return %arg0, %arg1, %c0_i32 : i32, i32, i32
  }
}

</mosaic_0001>

<llo_original>
// kernel: tpu_custom_call.1
$region0: #{tpu_custom_call.1}
  #allocation0 [shape = 'u32[]', space=smem, size = 0x4, offset = 0x4, fixed_abs, tag = 'smem constant byte address 0x4 - core index']
  #allocation1 [shape = 'u32[144,128]{1,0:T(1,128)}', space=vmem, size = 0x12000, scoped, tag = 'internal scratch']
  %s0 = inlined_call_operand.hbm [shape: bf16[2,8,32], index: 0, kind: input, shape index: {}]
  %s1 = inlined_call_operand.hbm [shape: bf16[32,96], index: 1, kind: input, shape index: {}]
  %s2 = inlined_call_operand.hbm [shape: bf16[2,8,96], index: 2, kind: output, shape index: {}]
  %s3 = sld [smem:[#allocation0]]
  $region49: #{tpu_custom_call.1} parent=0
    _
  %s5 = ssub.s32 1, %s3
  %s6 = scalar_select 0, %s5, %s3
  $region1: #{tpu_custom_call.1} parent=0
    #allocation2 [shape = 'u8[4096]{0}', space=vmem, size = 0x1000, scoped, tag = 'input window, operand 0']
    #allocation3 [shape = 's32[2]{0}', space=sflag, size = 0x8, scoped, tag = 'scoped memory for tpu_custom_call.1']
    #allocation4 [shape = 's32[2]{0}', space=sflag, size = 0x8, scoped, tag = 'scoped memory for tpu_custom_call.1']
    #allocation5 [shape = 'u8[8192]{0}', space=vmem, size = 0x2000, scoped, tag = 'input window, operand 1, single buffered']
    #allocation6 [shape = 's32[1]{0}', space=sflag, size = 0x4, scoped, tag = 'scoped memory for tpu_custom_call.1']
    #allocation7 [shape = 'u8[4096]{0}', space=vmem, size = 0x1000, scoped, tag = 'output window, operand 0']
    %7 = vsyncpa [#allocation3], 0
    %s8 = scalar_lea.sflag [#allocation3], 1
    %9 = vsyncpa %s8, 0
    %10 = vsyncpa [#allocation6], 0
    %11 = vsyncpa [#allocation4], 0
    %s12 = scalar_lea.sflag [#allocation4], 1
    %13 = vsyncpa %s12, 0
    loop: start=0, step=1, limit=4
    $region2: #{tpu_custom_call.1} parent=1 // loop_pre_header
      _
    $region3: #{tpu_custom_call.1} parent=1 // loop_header
      %s15 = sphi 0, %s19
      %p16 = scmp.ge.s32.totalorder %s15, 4
      %s22 = sphi 0, %s34
      %s23 = sphi 0, %s30
      %s24 = sphi 0, %s22
      %s25 = sphi 0, %s23
      %s26 = sphi 0, %s24
      %s27 = sphi 0, %s25
      %s39 = sphi 0, %s41
      %s42 = sphi 0, %s39
      %s43 = sphi 0, %s42
      %s59 = sphi 0, %s43
      %s63 = sphi 0, %s63
      %s65 = sphi 0, %s63
      %s66 = sphi 0, %s65
      %s80 = sphi 0, %s66
      %s88 = sphi 0, %s90
      %s91 = sphi 0, %s88
      %s92 = sphi 0, %s91
      %s108 = sphi 0, %s92
    $region4: #{tpu_custom_call.1} parent=1 // loop_header_branch
      %18 = sbr.rel (%p16) target = $region8
    $region5: #{tpu_custom_call.1} parent=1 // loop_body
      %s20 = ssub.s32 %s15, 1
      %s21 = ssub.s32 %s15, 2
      %s28 = sadd.s32 1, %s23
      %p29 = scmp.ge.s32.totalorder %s28, 1
      %s30 = scalar_select %p29, 0, %s28
      %s31 = sadd.s32 1, %s22
      %s32 = scalar_select %p29, %s31, %s22
      %p33 = scmp.ge.s32.totalorder %s32, 2
      %s34 = scalar_select %p33, 0, %s32
      %s35 = ssub.s32 %s22, %s34
      %s36 = ssub.s32 %s23, %s30
      %s37 = sor.u32 %s35, %s36
      %p38 = scmp.eq.s32.totalorder %s37, 0
      %s40 = sadd.s32 %s39, 1
      %s41 = scalar_select %p38, %s39, %s40
      %p44 = pneg %p38
      %p45 = scmp.eq.s32.totalorder %s15, 1
      %p46 = por %p44, %p45
      %p47 = scmp.ne.s32.totalorder %s39, %s42
      %p48 = scmp.eq.s32.totalorder %s15, 0
      %p49 = por %p47, %p48
      %p50 = scmp.ne.s32.totalorder %s39, %s42
      %p51 = scmp.eq.s32.totalorder %s20, 1
      %p52 = por %p50, %p51
      %p53 = scmp.ne.s32.totalorder %s42, %s43
      %p54 = scmp.eq.s32.totalorder %s20, 0
      %p55 = por %p53, %p54
      %p56 = scmp.ne.s32.totalorder %s42, %s43
      %p57 = scmp.eq.s32.totalorder %s21, 1
      %p58 = por %p56, %p57
      %p60 = scmp.ne.s32.totalorder %s43, %s59
      %p61 = scmp.eq.s32.totalorder %s21, 0
      %p62 = por %p60, %p61
      %s64 = sadd.s32 %s63, 1
      %p67 = scmp.eq.s32.totalorder %s15, 1
      %p68 = scmp.ne.s32.totalorder %s63, %s65
      %p69 = scmp.eq.s32.totalorder %s15, 0
      %p70 = por %p68, %p69
      %p71 = scmp.ne.s32.totalorder %s63, %s65
      %p72 = scmp.eq.s32.totalorder %s20, 1
      %p73 = por %p71, %p72
      %p74 = scmp.ne.s32.totalorder %s65, %s66
      %p75 = scmp.eq.s32.totalorder %s20, 0
      %p76 = por %p74, %p75
      %p77 = scmp.ne.s32.totalorder %s65, %s66
      %p78 = scmp.eq.s32.totalorder %s21, 1
      %p79 = por %p77, %p78
      %p81 = scmp.ne.s32.totalorder %s66, %s80
      %p82 = scmp.eq.s32.totalorder %s21, 0
      %p83 = por %p81, %p82
      %s84 = ssub.s32 %s22, %s34
      %s85 = ssub.s32 %s23, %s30
      %s86 = sor.u32 %s84, %s85
      %p87 = scmp.eq.s32.totalorder %s86, 0
      %s89 = sadd.s32 %s88, 1
      %s90 = scalar_select %p87, %s88, %s89
      %p93 = pneg %p87
      %p94 = scmp.eq.s32.totalorder %s15, 1
      %p95 = por %p93, %p94
      %p96 = scmp.ne.s32.totalorder %s88, %s91
      %p97 = scmp.eq.s32.totalorder %s15, 0
      %p98 = por %p96, %p97
      %p99 = scmp.ne.s32.totalorder %s88, %s91
      %p100 = scmp.eq.s32.totalorder %s20, 1
      %p101 = por %p99, %p100
      %p102 = scmp.ne.s32.totalorder %s91, %s92
      %p103 = scmp.eq.s32.totalorder %s20, 0
      %p104 = por %p102, %p103
      %p105 = scmp.ne.s32.totalorder %s91, %s92
      %p106 = scmp.eq.s32.totalorder %s21, 1
      %p107 = por %p105, %p106
      %p109 = scmp.ne.s32.totalorder %s92, %s108
      %p110 = scmp.eq.s32.totalorder %s21, 0
      %p111 = por %p109, %p110
      %p112 = scmp.le.s32.totalorder 1, %s15
      %p113 = scmp.lt.s32.totalorder %s15, 3
      %p114 = pnand %p112, %p113
      %p115 = pneg %p114
      // Predicated region
      $region9: #{tpu_custom_call.1} parent=5 // pred_check
        _
      $region10: #{tpu_custom_call.1} parent=5 // pred_check_branch
        %117 = sbr.rel (%p114) target = $region12
      $region11: #{tpu_custom_call.1} parent=5 // pred_region
        %s118 = ssub.s32 %s15, 1
        // Predicated region
        $region13: #{tpu_custom_call.1} parent=11 // pred_check
          %p119 = pneg %p76
        $region14: #{tpu_custom_call.1} parent=11 // pred_check_branch
          %121 = sbr.rel (%p119) target = $region16
        $region15: #{tpu_custom_call.1} parent=11 // pred_region
          %s123 = ssub.s32 256, 256
          %124 = vsyncadd [#allocation6], %s123
          %s125 = sshll.u32 [#allocation5], 4
          %s126 = int_to_ptr.vmem [resolvable:$true] %s125
          %131 = dma.hbm_to_vmem [thread:$0]  %s1, 256, %s126, [#allocation6], 64, 64, 4
        $region16: #{tpu_custom_call.1} parent=11 // pred_fallthru
          _
      $region12: #{tpu_custom_call.1} parent=5 // pred_fallthru
        _
      %p132 = scmp.lt.s32.totalorder %s15, 2
      // Predicated region
      $region17: #{tpu_custom_call.1} parent=5 // pred_check
        %p133 = pneg %p132
      $region18: #{tpu_custom_call.1} parent=5 // pred_check_branch
        %135 = sbr.rel (%p133) target = $region20
      $region19: #{tpu_custom_call.1} parent=5 // pred_region
        // Predicated region
        $region21: #{tpu_custom_call.1} parent=19 // pred_check
          %p136 = pneg %p49
        $region22: #{tpu_custom_call.1} parent=19 // pred_check_branch
          %138 = sbr.rel (%p136) target = $region24
        $region23: #{tpu_custom_call.1} parent=19 // pred_region
          %s139 = sand.u32 %s39, 1
          %s140 = scalar_lea.sflag [#allocation3], %s139
          %s141 = sand.u32 %s39, 1
          %s142 = smul.addr %s141, 4
          %s143 = scalar_lea.vmem [#allocation2], %s142
          %s145 = ssub.s32 64, 64
          %146 = vsyncadd %s140, %s145
          %s147 = sadd.s32 %s23, %s22
          %s148 = smul.addr %s147, 64
          %s149 = scalar_lea.hbm %s0, %s148
          %s151 = sshll.u32 %s143, 4
          %s152 = int_to_ptr.vmem [resolvable:$true] %s151
          %154 = dma.hbm_to_vmem [thread:$0]  %s149, 64, %s152, %s140
        $region24: #{tpu_custom_call.1} parent=19 // pred_fallthru
          _
      $region20: #{tpu_custom_call.1} parent=5 // pred_fallthru
        _
      %p155 = scmp.le.s32.totalorder 1, %s15
      %p156 = scmp.lt.s32.totalorder %s15, 3
      %p157 = pnand %p155, %p156
      %p158 = pneg %p157
      // Predicated region
      $region25: #{tpu_custom_call.1} parent=5 // pred_check
        _
      $region26: #{tpu_custom_call.1} parent=5 // pred_check_branch
        %160 = sbr.rel (%p157) target = $region28
      $region27: #{tpu_custom_call.1} parent=5 // pred_region
        %s161 = ssub.s32 %s15, 1
        %s162 = sand.u32 %s42, 1
        %s163 = scalar_lea.sflag [#allocation3], %s162
        %s164 = sand.u32 %s42, 1
        %s165 = smul.addr %s164, 4
        %s166 = scalar_lea.vmem [#allocation2], %s165
        // Predicated region
        $region29: #{tpu_custom_call.1} parent=27 // pred_check
          %p167 = pneg %p55
        $region30: #{tpu_custom_call.1} parent=27 // pred_check_branch
          %169 = sbr.rel (%p167) target = $region32
        $region31: #{tpu_custom_call.1} parent=27 // pred_region
          %170 = dma.done %s163, 64
        $region32: #{tpu_custom_call.1} parent=27 // pred_fallthru
          _
        // Predicated region
        $region33: #{tpu_custom_call.1} parent=27 // pred_check
          %p171 = pneg %p76
        $region34: #{tpu_custom_call.1} parent=27 // pred_check_branch
          %173 = sbr.rel (%p171) target = $region36
        $region35: #{tpu_custom_call.1} parent=27 // pred_region
          %174 = dma.done [#allocation6], 256
        $region36: #{tpu_custom_call.1} parent=27 // pred_fallthru
          _
        %s175 = sand.u32 %s42, 1
        %s176 = scalar_lea.sflag [#allocation3], %s175
        %s177 = sand.u32 %s42, 1
        %s178 = smul.addr %s177, 4
        %s179 = scalar_lea.vmem [#allocation2], %s178
        %p180 = pneg %p55
        %p181 = pneg %p52
        %p182 = pneg %p76
        %p183 = pneg %p73
        %p184 = pneg %p104
        %p185 = pneg %p101
        %s186 = sand.u32 %s91, 1
        %s187 = scalar_lea.sflag [#allocation4], %s186
        %s188 = sand.u32 %s91, 1
        %s189 = smul.addr %s188, 4
        %s190 = scalar_lea.vmem [#allocation7], %s189
        %v192 = vld [vmem:[%s166] sm:$0xf]
        %v193 = vld [vmem:[#allocation5] sm:$0xf]
        %v194 = vld [vmem:[#allocation5 + $0x4] sm:$0xf]
        %v195 = vld [vmem:[#allocation5 + $0x8] sm:$0xf]
        %v196 = vld [vmem:[#allocation5 + $0xc] sm:$0xf]
        %v201 = vunpack.c.l.b16 %v193
        %v202 = vunpack.c.l.b16 %v194
        %v203 = vunpack.c.l.b16 %v195
        %v204 = vunpack.c.l.b16 %v196
        %v205 = vpack.c.b16 %v202, %v201
        %v206 = vpack.c.b16 %v204, %v203
        %vm209 = vcmask 261120
        %v211 = vsel %vm209, %v192, 0
        %213 = vmatprep.subr.bf16.mxu0 0
        %214 = vmatpush1.bf16.msra.mxu0 0
        %215 = vmatprep.subr.bf16.mxu0 0
        %216 = vmatpush1.bf16.msra.mxu0 0
        %217 = vmatprep.subr.bf16.mxu0 0
        %218 = vmatpush1.bf16.msra.mxu0 0
        %219 = vmatprep.subr.bf16.mxu0 0
        %220 = vmatpush1.bf16.msra.mxu0 0
        %221 = vmatprep.subr.bf16.mxu0 0
        %222 = vmatpush1.bf16.msra.mxu0 0
        %223 = vmatprep.subr.bf16.mxu0 0
        %224 = vmatpush1.bf16.msra.mxu0 0
        %225 = vmatprep.subr.bf16.mxu0 0
        %226 = vmatpush1.bf16.msra.mxu0 %v206
        %227 = vmatprep.subr.bf16.mxu0 0
        %228 = vmatpush1.bf16.msra.mxu0 %v205
        %229 = vmatprep.subr.bf16.mxu0 0
        %230 = vmatpush2.bf16.msra.mxu0 0
        %231 = vmatprep.subr.bf16.mxu0 0
        %232 = vmatpush2.bf16.msra.mxu0 0
        %233 = vmatprep.subr.bf16.mxu0 0
        %234 = vmatpush2.bf16.msra.mxu0 0
        %235 = vmatprep.subr.bf16.mxu0 0
        %236 = vmatpush2.bf16.msra.mxu0 0
        %237 = vmatprep.subr.bf16.mxu0 0
        %238 = vmatpush2.bf16.msra.mxu0 0
        %239 = vmatprep.subr.bf16.mxu0 0
        %240 = vmatpush2.bf16.msra.mxu0 0
        %241 = vmatprep.subr.bf16.mxu0 0
        %242 = vmatpush2.bf16.msra.mxu0 0
        %243 = vmatprep.subr.bf16.mxu0 0
        %244 = vmatpush2.bf16.msra.mxu0 0
        %245 = vmatprep.mubr.bf16.mxu0 0
        %246 = vmatmul.mubr.bf16.gmra.mxu0 %v211
        %v247 = vpop.f32.mrf.mxu0
        %v248 = vadd.f32 0.0, %v247
        %v249 = vpop.f32.mrf.mxu0
        %v250 = vpop.f32.mrf.mxu0
        %v251 = vpop.f32.mrf.mxu0
        %252 = vdwg.mxu0
        %v253 = vpack.c.bf16 %v248, %v248
        %vm254 = vcmask 781312
        %255 = vst.msk [vmem:[%s190] sm:$0xf] %vm254, %v253
        %s256 = sand.u32 %s91, 1
        %s257 = scalar_lea.sflag [#allocation4], %s256
        %s258 = sand.u32 %s91, 1
        %s259 = smul.addr %s258, 4
        %s260 = scalar_lea.vmem [#allocation7], %s259
        // Predicated region
        $region37: #{tpu_custom_call.1} parent=27 // pred_check
          %p261 = pneg %p101
        $region38: #{tpu_custom_call.1} parent=27 // pred_check_branch
          %263 = sbr.rel (%p261) target = $region40
        $region39: #{tpu_custom_call.1} parent=27 // pred_region
          %s265 = ssub.s32 64, 64
          %266 = vsyncadd %s257, %s265
          %s267 = sadd.s32 %s25, %s24
          %s268 = smul.addr %s267, 64
          %s269 = scalar_lea.hbm %s2, %s268
          %s271 = sshll.u32 %s260, 4
          %s272 = int_to_ptr.vmem [resolvable:$true] %s271
          %274 = dma.vmem_to_hbm [thread:$0]  %s272, 64, %s269, %s257
        $region40: #{tpu_custom_call.1} parent=27 // pred_fallthru
          _
      $region28: #{tpu_custom_call.1} parent=5 // pred_fallthru
        _
      %p275 = scmp.le.s32.totalorder 2, %s15
      // Predicated region
      $region41: #{tpu_custom_call.1} parent=5 // pred_check
        %p276 = pneg %p275
      $region42: #{tpu_custom_call.1} parent=5 // pred_check_branch
        %278 = sbr.rel (%p276) target = $region44
      $region43: #{tpu_custom_call.1} parent=5 // pred_region
        %s279 = ssub.s32 %s15, 2
        // Predicated region
        $region45: #{tpu_custom_call.1} parent=43 // pred_check
          %p280 = pneg %p107
        $region46: #{tpu_custom_call.1} parent=43 // pred_check_branch
          %282 = sbr.rel (%p280) target = $region48
        $region47: #{tpu_custom_call.1} parent=43 // pred_region
          %s283 = sand.u32 %s92, 1
          %s284 = scalar_lea.sflag [#allocation4], %s283
          %s285 = sand.u32 %s92, 1
          %s286 = smul.addr %s285, 4
          %s287 = scalar_lea.vmem [#allocation7], %s286
          %288 = dma.done %s284, 64
        $region48: #{tpu_custom_call.1} parent=43 // pred_fallthru
          _
      $region44: #{tpu_custom_call.1} parent=5 // pred_fallthru
        _
    $region6: #{tpu_custom_call.1} parent=1 // loop_footer
      %s19 = sadd.s32 1, %s15
    $region7: #{tpu_custom_call.1} parent=1 // loop_footer_branch
      %14 = sbr.rel target = $region3
    $region8: #{tpu_custom_call.1} parent=1 // loop_exit
      _
    %289 = vsyncpa [#allocation3], 1
    %s290 = scalar_lea.sflag [#allocation3], 1
    %291 = vsyncpa %s290, 1
    %292 = vsyncpa [#allocation6], 1
    %293 = vsyncpa [#allocation4], 1
    %s294 = scalar_lea.sflag [#allocation4], 1
    %295 = vsyncpa %s294, 1

</llo_original>
